<compile_context>
chip_gen: v5e
topology: v5e:2x2
jax: 0.10.0
libtpu: 0.0.40
codegen_flags: <defaults>
</compile_context>

<pallas_src>
import functools
import math

import jax
import jax.numpy as jnp
import numpy as np
from jax.experimental import pallas as pl
from jax.experimental.pallas import tpu as pltpu


def _round_up(n: int, m: int) -> int:
  return ((n + m - 1) // m) * m


def _ceil_div(a: int, b: int) -> int:
  return -(-a // b)


# ---------------------------------------------------------------------------
# One-time parameter preparation (call OUTSIDE the per-step forward).
# ---------------------------------------------------------------------------
def prepare_params(w1, w2, *, compute_dtype=jnp.bfloat16):
  """Transpose torch (out,in) weights -> (in,out), pad out_dim to 128, cast.

  Returns (w1t_padded, w2t_padded) with shapes (din, dpad) and (dpad, dpad),
  where dpad = round_up(out_dim, 128).  Zero padding is exact for bias-free
  linears followed by ReLU.
  """
  dout, din = w1.shape
  assert w2.shape == (dout, dout)
  dpad = _round_up(dout, 128)
  w1t = jnp.transpose(w1).astype(compute_dtype)   # (din, dout)
  w2t = jnp.transpose(w2).astype(compute_dtype)   # (dout, dout)
  if dpad != dout:
    w1t = jnp.pad(w1t, ((0, 0), (0, dpad - dout)))
    w2t = jnp.pad(w2t, ((0, dpad - dout), (0, dpad - dout)))
  return w1t, w2t


# ---------------------------------------------------------------------------
# Kernel: one row tile of ReLU(x @ W1^T) @ W2^T (weights already transposed).
# ---------------------------------------------------------------------------
def _projection_block_kernel(x_ref, w1t_ref, w2t_ref, o_ref):
  x = x_ref[...].astype(w1t_ref.dtype)                         # bf16 MXU input
  h = jnp.dot(x, w1t_ref[...], preferred_element_type=jnp.float32)
  h = jnp.maximum(h, 0.0)                                      # ReLU in f32 (VPU)
  o = jnp.dot(h.astype(w2t_ref.dtype), w2t_ref[...],
              preferred_element_type=jnp.float32)
  o_ref[...] = o.astype(o_ref.dtype)


def _pick_row_tile(n: int, row_tile: int) -> int:
  """Row tile: multiple of 256 when n is large; otherwise split into >= 2
  tiles (prefer 128-aligned, fall back to the f32 sublane pack of 8) so the
  'parallel' row axis feeds both v7x TensorCores."""
  if n >= 2 * row_tile:
    return row_tile
  for align in (128, 8):
    tr = _round_up(max(1, _ceil_div(n, 2)), align)
    if _ceil_div(n, tr) >= 2 or align == 8:
      return min(tr, _round_up(n, 8))
  return _round_up(n, 8)  # unreachable


def _weight_spec(shape, single_buffer: bool):
  if single_buffer:
    # Constant block index -> the tile is grid-invariant; single-buffer it.
    return pl.BlockSpec(shape, lambda i: (0, 0),
                        pipeline_mode=pl.Buffered(buffer_count=1))
  return pl.BlockSpec(shape, lambda i: (0, 0))


@functools.partial(
    jax.jit, static_argnames=("out_dim", "row_tile", "single_buffer_weights"))
def _forward(x, w1t, w2t, *, out_dim, row_tile, single_buffer_weights):
  *lead, din = x.shape
  din_w, dpad = w1t.shape
  assert din_w == din
  assert w2t.shape == (dpad, dpad)

  n = math.prod(lead) if lead else 1
  x2 = x.reshape(n, din)

  tr = _pick_row_tile(n, row_tile)
  grid_rows = _ceil_div(n, tr)          # no activation padding; edge tile masked

  itemsize_x = x.dtype.itemsize
  itemsize_w = w1t.dtype.itemsize
  weight_bytes = (w1t.size + w2t.size) * itemsize_w
  n_w_bufs = 1 if single_buffer_weights else 2
  vmem_need = (weight_bytes * n_w_bufs
               + 2 * tr * din * itemsize_x          # double-buffered x tile
               + 2 * tr * dpad * itemsize_x)        # double-buffered out tile
  vmem_limit = int(min(128 * 1024 * 1024, max(32 * 1024 * 1024, 2 * vmem_need)))

  cost = pl.CostEstimate(
      flops=2 * n * din * dpad + 2 * n * dpad * dpad,
      transcendentals=0,
      bytes_accessed=(x2.size * itemsize_x + weight_bytes
                      + n * dpad * itemsize_x))

  out = pl.pallas_call(
      _projection_block_kernel,
      out_shape=jax.ShapeDtypeStruct((n, dpad), x.dtype),
      grid_spec=pltpu.PrefetchScalarGridSpec(
          num_scalar_prefetch=0,
          grid=(grid_rows,),
          in_specs=[
              pl.BlockSpec((tr, din), lambda i: (i, 0)),        # x row tile
              _weight_spec((din, dpad), single_buffer_weights),  # W1^T resident
              _weight_spec((dpad, dpad), single_buffer_weights),  # W2^T resident
          ],
          out_specs=pl.BlockSpec((tr, dpad), lambda i: (i, 0)),
      ),
      compiler_params=pltpu.CompilerParams(
          dimension_semantics=("parallel",),
          vmem_limit_bytes=vmem_limit),
      cost_estimate=cost,
  )(x2, w1t, w2t)

  if dpad != out_dim:
    out = out[:, :out_dim]
  return out.reshape(*lead, out_dim)


# Cached decision: does this JAX build accept pl.Buffered(1) on a BlockSpec?
_SINGLE_BUFFER_OK = None


def projection_block_convirt(x, w1t, w2t, *, out_dim, row_tile=256):
  """Fused Pallas forward of ProjectionBlockConVirt.

  Args:
    x:    (..., input_dim) activations (any float dtype; f32 in the demo).
    w1t:  (input_dim, dpad)  prepared weight (see prepare_params).
    w2t:  (dpad, dpad)       prepared weight.
    out_dim: logical output_dim (pre-padding).
  """
  global _SINGLE_BUFFER_OK
  if _SINGLE_BUFFER_OK is None:
    try:
      out = _forward(x, w1t, w2t, out_dim=out_dim, row_tile=row_tile,
                     single_buffer_weights=True)
      _SINGLE_BUFFER_OK = True
      return out
    except Exception:
      _SINGLE_BUFFER_OK = False
  return _forward(x, w1t, w2t, out_dim=out_dim, row_tile=row_tile,
                  single_buffer_weights=_SINGLE_BUFFER_OK)


def reference_jax(x, w1, w2, compute_dtype=jnp.bfloat16):
  """Pure-JAX reference with the same bf16-operand / f32-accumulate numerics."""
  xb = x.astype(compute_dtype)
  h = jnp.dot(xb, jnp.transpose(w1).astype(compute_dtype),
              preferred_element_type=jnp.float32)
  h = jnp.maximum(h, 0.0)
  o = jnp.dot(h.astype(compute_dtype), jnp.transpose(w2).astype(compute_dtype),
              preferred_element_type=jnp.float32)
  return o.astype(x.dtype)


if __name__ == "__main__":
  # Small shapes consistent with the module: x is (batch, seq, input_dim).
  batch, seq = 2, 8
  input_dim, output_dim = 64, 32

  key = jax.random.PRNGKey(0)
  kx, k1, k2 = jax.random.split(key, 3)

  x = jax.random.normal(kx, (batch, seq, input_dim), jnp.float32)
  # torch nn.Linear weight layout: (out_features, in_features), no bias.
  w1 = jax.random.normal(k1, (output_dim, input_dim), jnp.float32) * (
      1.0 / np.sqrt(input_dim))
  w2 = jax.random.normal(k2, (output_dim, output_dim), jnp.float32) * (
      1.0 / np.sqrt(output_dim))

  # One-time parameter prep (transpose + pad-to-128 + bf16) OUTSIDE the forward.
  w1t, w2t = prepare_params(w1, w2)
  w1t, w2t = jax.block_until_ready((w1t, w2t))

  out = projection_block_convirt(x, w1t, w2t, out_dim=output_dim)
  out = jax.block_until_ready(out)

  ref = reference_jax(x, w1, w2)
  np.testing.assert_allclose(np.asarray(out), np.asarray(ref),
                             rtol=1e-2, atol=1e-2)

  print("KERNEL_OK")
</pallas_src>

<mosaic_0001>
module attributes {stable_mosaic.version = 11 : i64} {
  func.func @_projection_block_kernel(%arg0: i32, %arg1: memref<8x64xf32, #tpu.memory_space<vmem>>, %arg2: memref<64x128xbf16, #tpu.memory_space<vmem>>, %arg3: memref<128x128xbf16, #tpu.memory_space<vmem>>, %arg4: memref<8x128xf32, #tpu.memory_space<vmem>>) attributes {dimension_semantics = [#tpu.dimension_semantics<parallel>], iteration_bounds = array<i64: 2>, scalar_prefetch = 0 : i64, scratch_operands = 0 : i64, tpu.core_type = #tpu.core_type<tc>, window_params = [{transform_indices = @transform_0, window_bounds = array<i64: 8, 64>}, {pipeline_mode = #tpu.pipeline_mode<synchronous>, transform_indices = @transform_1, window_bounds = array<i64: 64, 128>}, {pipeline_mode = #tpu.pipeline_mode<synchronous>, transform_indices = @transform_2, window_bounds = array<i64: 128, 128>}, {transform_indices = @transform_3, window_bounds = array<i64: 8, 128>}]} {
    %c0 = arith.constant 0 : index
    %c0_0 = arith.constant 0 : index
    %0 = vector.load %arg1[%c0, %c0_0] : memref<8x64xf32, #tpu.memory_space<vmem>>, vector<8x64xf32>
    %1 = arith.truncf %0 : vector<8x64xf32> to vector<8x64xbf16>
    %c0_1 = arith.constant 0 : index
    %c0_2 = arith.constant 0 : index
    %2 = vector.load %arg2[%c0_1, %c0_2] : memref<64x128xbf16, #tpu.memory_space<vmem>>, vector<64x128xbf16>
    %cst = arith.constant dense<0.000000e+00> : vector<8x128xf32>
    %3 = tpu.matmul %1, %2, %cst {dimension_numbers = #tpu.dot_dimension_numbers<[1], [0], [0], [1], [0, 0, 1, 1], [], []>} : vector<8x64xbf16>, vector<64x128xbf16>, vector<8x128xf32> -> vector<8x128xf32>
    %cst_3 = arith.constant 0.000000e+00 : f32
    %4 = vector.broadcast %cst_3 : f32 to vector<8x128xf32>
    %5 = arith.maximumf %3, %4 : vector<8x128xf32>
    %6 = arith.truncf %5 : vector<8x128xf32> to vector<8x128xbf16>
    %c0_4 = arith.constant 0 : index
    %c0_5 = arith.constant 0 : index
    %7 = vector.load %arg3[%c0_4, %c0_5] : memref<128x128xbf16, #tpu.memory_space<vmem>>, vector<128x128xbf16>
    %cst_6 = arith.constant dense<0.000000e+00> : vector<8x128xf32>
    %8 = tpu.matmul %6, %7, %cst_6 {dimension_numbers = #tpu.dot_dimension_numbers<[1], [0], [0], [1], [0, 0, 1, 1], [], []>} : vector<8x128xbf16>, vector<128x128xbf16>, vector<8x128xf32> -> vector<8x128xf32>
    %c0_7 = arith.constant 0 : index
    %c0_8 = arith.constant 0 : index
    %9 = vector.load %arg4[%c0_7, %c0_8] : memref<8x128xf32, #tpu.memory_space<vmem>>, vector<8x128xf32>
    tpu.vector_store %arg4[%c0_7, %c0_8], %8 {strides = array<i32>} : memref<8x128xf32, #tpu.memory_space<vmem>>, vector<8x128xf32>,
    return
  }
  func.func @transform_0(%arg0: i32) -> (i32, i32) {
    %c0_i32 = arith.constant 0 : i32
    %c0_i32_0 = arith.constant 0 : i32
    return %arg0, %c0_i32 : i32, i32
  }
  func.func @transform_1(%arg0: i32) -> (i32, i32) {
    %c0_i32 = arith.constant 0 : i32
    %c0_i32_0 = arith.constant 0 : i32
    %c0_i32_1 = arith.constant 0 : i32
    return %c0_i32, %c0_i32_0 : i32, i32
  }
  func.func @transform_2(%arg0: i32) -> (i32, i32) {
    %c0_i32 = arith.constant 0 : i32
    %c0_i32_0 = arith.constant 0 : i32
    %c0_i32_1 = arith.constant 0 : i32
    return %c0_i32, %c0_i32_0 : i32, i32
  }
  func.func @transform_3(%arg0: i32) -> (i32, i32) {
    %c0_i32 = arith.constant 0 : i32
    %c0_i32_0 = arith.constant 0 : i32
    return %arg0, %c0_i32 : i32, i32
  }
}

module attributes {stable_mosaic.version = 11 : i64} {
  func.func @_projection_block_kernel(%arg0: i32, %arg1: memref<8x64xf32, #tpu.memory_space<vmem>>, %arg2: memref<64x128xbf16, #tpu.memory_space<vmem>>, %arg3: memref<128x128xbf16, #tpu.memory_space<vmem>>, %arg4: memref<8x128xf32, #tpu.memory_space<vmem>>) attributes {dimension_semantics = [#tpu.dimension_semantics<parallel>], iteration_bounds = array<i64: 2>, scalar_prefetch = 0 : i64, scratch_operands = 0 : i64, tpu.core_type = #tpu.core_type<tc>, window_params = [{transform_indices = @transform_0, window_bounds = array<i64: 8, 64>}, {pipeline_mode = #tpu.pipeline_mode<synchronous>, transform_indices = @transform_1, window_bounds = array<i64: 64, 128>}, {pipeline_mode = #tpu.pipeline_mode<synchronous>, transform_indices = @transform_2, window_bounds = array<i64: 128, 128>}, {transform_indices = @transform_3, window_bounds = array<i64: 8, 128>}]} {
    %c0 = arith.constant 0 : index
    %c0_0 = arith.constant 0 : index
    %0 = vector.load %arg1[%c0, %c0_0] : memref<8x64xf32, #tpu.memory_space<vmem>>, vector<8x64xf32>
    %1 = arith.truncf %0 : vector<8x64xf32> to vector<8x64xbf16>
    %c0_1 = arith.constant 0 : index
    %c0_2 = arith.constant 0 : index
    %2 = vector.load %arg2[%c0_1, %c0_2] : memref<64x128xbf16, #tpu.memory_space<vmem>>, vector<64x128xbf16>
    %cst = arith.constant dense<0.000000e+00> : vector<8x128xf32>
    %3 = tpu.matmul %1, %2, %cst {dimension_numbers = #tpu.dot_dimension_numbers<[1], [0], [0], [1], [0, 0, 1, 1], [], []>} : vector<8x64xbf16>, vector<64x128xbf16>, vector<8x128xf32> -> vector<8x128xf32>
    %cst_3 = arith.constant 0.000000e+00 : f32
    %4 = vector.broadcast %cst_3 : f32 to vector<8x128xf32>
    %5 = arith.maximumf %3, %4 : vector<8x128xf32>
    %6 = arith.truncf %5 : vector<8x128xf32> to vector<8x128xbf16>
    %c0_4 = arith.constant 0 : index
    %c0_5 = arith.constant 0 : index
    %7 = vector.load %arg3[%c0_4, %c0_5] : memref<128x128xbf16, #tpu.memory_space<vmem>>, vector<128x128xbf16>
    %cst_6 = arith.constant dense<0.000000e+00> : vector<8x128xf32>
    %8 = tpu.matmul %6, %7, %cst_6 {dimension_numbers = #tpu.dot_dimension_numbers<[1], [0], [0], [1], [0, 0, 1, 1], [], []>} : vector<8x128xbf16>, vector<128x128xbf16>, vector<8x128xf32> -> vector<8x128xf32>
    %c0_7 = arith.constant 0 : index
    %c0_8 = arith.constant 0 : index
    %9 = vector.load %arg4[%c0_7, %c0_8] : memref<8x128xf32, #tpu.memory_space<vmem>>, vector<8x128xf32>
    tpu.vector_store %arg4[%c0_7, %c0_8], %8 {strides = array<i32>} : memref<8x128xf32, #tpu.memory_space<vmem>>, vector<8x128xf32>,
    return
  }
  func.func @transform_0(%arg0: i32) -> (i32, i32) {
    %c0_i32 = arith.constant 0 : i32
    %c0_i32_0 = arith.constant 0 : i32
    return %arg0, %c0_i32 : i32, i32
  }
  func.func @transform_1(%arg0: i32) -> (i32, i32) {
    %c0_i32 = arith.constant 0 : i32
    %c0_i32_0 = arith.constant 0 : i32
    %c0_i32_1 = arith.constant 0 : i32
    return %c0_i32, %c0_i32_0 : i32, i32
  }
  func.func @transform_2(%arg0: i32) -> (i32, i32) {
    %c0_i32 = arith.constant 0 : i32
    %c0_i32_0 = arith.constant 0 : i32
    %c0_i32_1 = arith.constant 0 : i32
    return %c0_i32, %c0_i32_0 : i32, i32
  }
  func.func @transform_3(%arg0: i32) -> (i32, i32) {
    %c0_i32 = arith.constant 0 : i32
    %c0_i32_0 = arith.constant 0 : i32
    return %arg0, %c0_i32 : i32, i32
  }
}

</mosaic_0001>

<llo_original>
// kernel: _forward.1
$region0: #{_forward.1}
  #allocation0 [shape = 'u32[]', space=smem, size = 0x4, offset = 0x4, fixed_abs, tag = 'smem constant byte address 0x4 - core index']
  #allocation1 [shape = 'u32[72,128]{1,0:T(1,128)}', space=vmem, size = 0x9000, scoped, tag = 'internal scratch']
  %s0 = inlined_call_operand.hbm [shape: f32[16,64], index: 0, kind: input, shape index: {}]
  %s1 = inlined_call_operand.hbm [shape: bf16[64,128], index: 1, kind: input, shape index: {}]
  %s2 = inlined_call_operand.hbm [shape: bf16[128,128], index: 2, kind: input, shape index: {}]
  %s3 = inlined_call_operand.vmem [shape: f32[16,128], index: 3, kind: output, shape index: {}]
  %s4 = sld [smem:[#allocation0]]
  $region57: #{_forward.1} parent=0
    _
  %s6 = ssub.s32 1, %s4
  %s7 = scalar_select 0, %s6, %s4
  $region1: #{_forward.1} parent=0
    #allocation2 [shape = 'u8[8192]{0}', space=vmem, size = 0x2000, scoped, tag = 'input window, operand 0']
    #allocation3 [shape = 's32[2]{0}', space=sflag, size = 0x8, scoped, tag = 'scoped memory for _forward.1']
    #allocation4 [shape = 'u8[16384]{0}', space=vmem, size = 0x4000, scoped, tag = 'input window, operand 1, single buffered']
    #allocation5 [shape = 's32[1]{0}', space=sflag, size = 0x4, scoped, tag = 'scoped memory for _forward.1']
    #allocation6 [shape = 'u8[32768]{0}', space=vmem, size = 0x8000, scoped, tag = 'input window, operand 2, single buffered']
    %8 = vsyncpa [#allocation3], 0
    %s9 = scalar_lea.sflag [#allocation3], 1
    %10 = vsyncpa %s9, 0
    %11 = vsyncpa [#allocation5], 0
    loop: start=0, step=1, limit=4
    $region2: #{_forward.1} parent=1 // loop_pre_header
      _
    $region3: #{_forward.1} parent=1 // loop_header
      %s13 = sphi 0, %s17
      %p14 = scmp.ge.s32.totalorder %s13, 4
      %s23 = sphi 0, %s25
      %s26 = sphi 0, %s23
      %s27 = sphi 0, %s26
      %s43 = sphi 0, %s27
      %s47 = sphi 0, %s47
      %s49 = sphi 0, %s47
      %s50 = sphi 0, %s49
      %s64 = sphi 0, %s50
      %s68 = sphi 0, %s68
      %s70 = sphi 0, %s68
      %s71 = sphi 0, %s70
      %s85 = sphi 0, %s71
      %s91 = sphi 0, %s93
      %s94 = sphi 0, %s91
      %s95 = sphi 0, %s94
      %s111 = sphi 0, %s95
    $region4: #{_forward.1} parent=1 // loop_header_branch
      %16 = sbr.rel (%p14) target = $region8
    $region5: #{_forward.1} parent=1 // loop_body
      %s18 = ssub.s32 %s13, 1
      %s19 = ssub.s32 %s13, 2
      %s20 = sadd.s32 %s13, 1
      %s21 = ssub.s32 %s13, %s20
      %p22 = scmp.eq.s32.totalorder %s21, 0
      %s24 = sadd.s32 %s23, 1
      %s25 = scalar_select %p22, %s23, %s24
      %p28 = pneg %p22
      %p29 = scmp.eq.s32.totalorder %s13, 1
      %p30 = por %p28, %p29
      %p31 = scmp.ne.s32.totalorder %s23, %s26
      %p32 = scmp.eq.s32.totalorder %s13, 0
      %p33 = por %p31, %p32
      %p34 = scmp.ne.s32.totalorder %s23, %s26
      %p35 = scmp.eq.s32.totalorder %s18, 1
      %p36 = por %p34, %p35
      %p37 = scmp.ne.s32.totalorder %s26, %s27
      %p38 = scmp.eq.s32.totalorder %s18, 0
      %p39 = por %p37, %p38
      %p40 = scmp.ne.s32.totalorder %s26, %s27
      %p41 = scmp.eq.s32.totalorder %s19, 1
      %p42 = por %p40, %p41
      %p44 = scmp.ne.s32.totalorder %s27, %s43
      %p45 = scmp.eq.s32.totalorder %s19, 0
      %p46 = por %p44, %p45
      %s48 = sadd.s32 %s47, 1
      %p51 = scmp.eq.s32.totalorder %s13, 1
      %p52 = scmp.ne.s32.totalorder %s47, %s49
      %p53 = scmp.eq.s32.totalorder %s13, 0
      %p54 = por %p52, %p53
      %p55 = scmp.ne.s32.totalorder %s47, %s49
      %p56 = scmp.eq.s32.totalorder %s18, 1
      %p57 = por %p55, %p56
      %p58 = scmp.ne.s32.totalorder %s49, %s50
      %p59 = scmp.eq.s32.totalorder %s18, 0
      %p60 = por %p58, %p59
      %p61 = scmp.ne.s32.totalorder %s49, %s50
      %p62 = scmp.eq.s32.totalorder %s19, 1
      %p63 = por %p61, %p62
      %p65 = scmp.ne.s32.totalorder %s50, %s64
      %p66 = scmp.eq.s32.totalorder %s19, 0
      %p67 = por %p65, %p66
      %s69 = sadd.s32 %s68, 1
      %p72 = scmp.eq.s32.totalorder %s13, 1
      %p73 = scmp.ne.s32.totalorder %s68, %s70
      %p74 = scmp.eq.s32.totalorder %s13, 0
      %p75 = por %p73, %p74
      %p76 = scmp.ne.s32.totalorder %s68, %s70
      %p77 = scmp.eq.s32.totalorder %s18, 1
      %p78 = por %p76, %p77
      %p79 = scmp.ne.s32.totalorder %s70, %s71
      %p80 = scmp.eq.s32.totalorder %s18, 0
      %p81 = por %p79, %p80
      %p82 = scmp.ne.s32.totalorder %s70, %s71
      %p83 = scmp.eq.s32.totalorder %s19, 1
      %p84 = por %p82, %p83
      %p86 = scmp.ne.s32.totalorder %s71, %s85
      %p87 = scmp.eq.s32.totalorder %s19, 0
      %p88 = por %p86, %p87
      %s89 = ssub.s32 %s13, %s20
      %p90 = scmp.eq.s32.totalorder %s89, 0
      %s92 = sadd.s32 %s91, 1
      %s93 = scalar_select %p90, %s91, %s92
      %p96 = pneg %p90
      %p97 = scmp.eq.s32.totalorder %s13, 1
      %p98 = por %p96, %p97
      %p99 = scmp.ne.s32.totalorder %s91, %s94
      %p100 = scmp.eq.s32.totalorder %s13, 0
      %p101 = por %p99, %p100
      %p102 = scmp.ne.s32.totalorder %s91, %s94
      %p103 = scmp.eq.s32.totalorder %s18, 1
      %p104 = por %p102, %p103
      %p105 = scmp.ne.s32.totalorder %s94, %s95
      %p106 = scmp.eq.s32.totalorder %s18, 0
      %p107 = por %p105, %p106
      %p108 = scmp.ne.s32.totalorder %s94, %s95
      %p109 = scmp.eq.s32.totalorder %s19, 1
      %p110 = por %p108, %p109
      %p112 = scmp.ne.s32.totalorder %s95, %s111
      %p113 = scmp.eq.s32.totalorder %s19, 0
      %p114 = por %p112, %p113
      %p115 = scmp.le.s32.totalorder 1, %s13
      %p116 = scmp.lt.s32.totalorder %s13, 3
      %p117 = pnand %p115, %p116
      %p118 = pneg %p117
      // Predicated region
      $region9: #{_forward.1} parent=5 // pred_check
        _
      $region10: #{_forward.1} parent=5 // pred_check_branch
        %120 = sbr.rel (%p117) target = $region12
      $region11: #{_forward.1} parent=5 // pred_region
        %s121 = ssub.s32 %s13, 1
        // Predicated region
        $region13: #{_forward.1} parent=11 // pred_check
          %p122 = pneg %p60
        $region14: #{_forward.1} parent=11 // pred_check_branch
          %124 = sbr.rel (%p122) target = $region16
        $region15: #{_forward.1} parent=11 // pred_region
          %126 = vsyncadd [#allocation5], 0
          %s127 = sshll.u32 %s1, 4
          %s128 = int_to_ptr.hbm [resolvable:$true] %s127
          %s129 = sshll.u32 [#allocation4], 4
          %s130 = int_to_ptr.vmem [resolvable:$true] %s129
          %135 = dma.hbm_to_vmem [thread:$0]  %s128, 512, %s130, [#allocation5], 64, 64, 4
        $region16: #{_forward.1} parent=11 // pred_fallthru
          _
        // Predicated region
        $region17: #{_forward.1} parent=11 // pred_check
          %p136 = pneg %p81
        $region18: #{_forward.1} parent=11 // pred_check_branch
          %138 = sbr.rel (%p136) target = $region20
        $region19: #{_forward.1} parent=11 // pred_region
          %140 = vsyncadd [#allocation5], 0
          %s141 = sshll.u32 %s2, 4
          %s142 = int_to_ptr.hbm [resolvable:$true] %s141
          %s143 = sshll.u32 [#allocation6], 4
          %s144 = int_to_ptr.vmem [resolvable:$true] %s143
          %149 = dma.hbm_to_vmem [thread:$0]  %s142, 1024, %s144, [#allocation5], 64, 64, 4
        $region20: #{_forward.1} parent=11 // pred_fallthru
          _
      $region12: #{_forward.1} parent=5 // pred_fallthru
        _
      %p150 = scmp.lt.s32.totalorder %s13, 2
      // Predicated region
      $region21: #{_forward.1} parent=5 // pred_check
        %p151 = pneg %p150
      $region22: #{_forward.1} parent=5 // pred_check_branch
        %153 = sbr.rel (%p151) target = $region24
      $region23: #{_forward.1} parent=5 // pred_region
        // Predicated region
        $region25: #{_forward.1} parent=23 // pred_check
          %p154 = pneg %p33
        $region26: #{_forward.1} parent=23 // pred_check_branch
          %156 = sbr.rel (%p154) target = $region28
        $region27: #{_forward.1} parent=23 // pred_region
          %s157 = sand.u32 %s23, 1
          %s158 = scalar_lea.sflag [#allocation3], %s157
          %s159 = sand.u32 %s23, 1
          %s160 = smul.addr %s159, 8
          %s161 = scalar_lea.vmem [#allocation2], %s160
          %163 = vsyncadd %s158, 0
          %s164 = smul.addr %s13, 8
          %s165 = scalar_lea.hbm %s0, %s164
          %s167 = sshll.u32 %s165, 4
          %s168 = int_to_ptr.hbm [resolvable:$true] %s167
          %s169 = sshll.u32 %s161, 4
          %s170 = int_to_ptr.vmem [resolvable:$true] %s169
          %172 = dma.hbm_to_vmem [thread:$0]  %s168, 128, %s170, %s158
        $region28: #{_forward.1} parent=23 // pred_fallthru
          _
      $region24: #{_forward.1} parent=5 // pred_fallthru
        _
      %p173 = scmp.le.s32.totalorder 1, %s13
      %p174 = scmp.lt.s32.totalorder %s13, 3
      %p175 = pnand %p173, %p174
      %p176 = pneg %p175
      // Predicated region
      $region29: #{_forward.1} parent=5 // pred_check
        _
      $region30: #{_forward.1} parent=5 // pred_check_branch
        %178 = sbr.rel (%p175) target = $region32
      $region31: #{_forward.1} parent=5 // pred_region
        %s179 = ssub.s32 %s13, 1
        %s180 = sand.u32 %s26, 1
        %s181 = scalar_lea.sflag [#allocation3], %s180
        %s182 = sand.u32 %s26, 1
        %s183 = smul.addr %s182, 8
        %s184 = scalar_lea.vmem [#allocation2], %s183
        // Predicated region
        $region33: #{_forward.1} parent=31 // pred_check
          %p185 = pneg %p39
        $region34: #{_forward.1} parent=31 // pred_check_branch
          %187 = sbr.rel (%p185) target = $region36
        $region35: #{_forward.1} parent=31 // pred_region
          %189 = dma.done %s181, 128
        $region36: #{_forward.1} parent=31 // pred_fallthru
          _
        // Predicated region
        $region37: #{_forward.1} parent=31 // pred_check
          %p190 = pneg %p60
        $region38: #{_forward.1} parent=31 // pred_check_branch
          %192 = sbr.rel (%p190) target = $region40
        $region39: #{_forward.1} parent=31 // pred_region
          %194 = dma.done [#allocation5], 512
        $region40: #{_forward.1} parent=31 // pred_fallthru
          _
        // Predicated region
        $region41: #{_forward.1} parent=31 // pred_check
          %p195 = pneg %p81
        $region42: #{_forward.1} parent=31 // pred_check_branch
          %197 = sbr.rel (%p195) target = $region44
        $region43: #{_forward.1} parent=31 // pred_region
          %199 = dma.done [#allocation5], 1024
        $region44: #{_forward.1} parent=31 // pred_fallthru
          _
        %s200 = sand.u32 %s26, 1
        %s201 = scalar_lea.sflag [#allocation3], %s200
        %s202 = sand.u32 %s26, 1
        %s203 = smul.addr %s202, 8
        %s204 = scalar_lea.vmem [#allocation2], %s203
        %p205 = pneg %p39
        %p206 = pneg %p36
        %p207 = pneg %p60
        %p208 = pneg %p57
        %p209 = pneg %p81
        %p210 = pneg %p78
        %p211 = pneg %p107
        %p212 = pneg %p104
        %p213 = scmp.lt.s32.totalorder %s18, 1
        %s214 = scalar_select %p213, %s18, 1
        %s215 = smul.addr %s214, 8
        %s216 = scalar_lea.vmem %s3, %s215
        %p217 = scmp.lt.s32.totalorder %s18, 1
        %s218 = scalar_select %p217, %s18, 1
        %s219 = smul.addr %s218, 8
        %s220 = scalar_lea.vmem %s3, %s219
        %v222 = vld [vmem:[%s184] sm:$0xff]
        %v223 = vpack.c.bf16 %v222, %v222
        %v224 = vld [vmem:[#allocation4] sm:$0xf]
        %v225 = vld [vmem:[#allocation4 + $0x4] sm:$0xf]
        %v226 = vld [vmem:[#allocation4 + $0x8] sm:$0xf]
        %v227 = vld [vmem:[#allocation4 + $0xc] sm:$0xf]
        %v228 = vld [vmem:[#allocation4 + $0x10] sm:$0xf]
        %v229 = vld [vmem:[#allocation4 + $0x14] sm:$0xf]
        %v230 = vld [vmem:[#allocation4 + $0x18] sm:$0xf]
        %v231 = vld [vmem:[#allocation4 + $0x1c] sm:$0xf]
        %v240 = vunpack.c.l.b16 %v224
        %v241 = vunpack.c.l.b16 %v225
        %v242 = vunpack.c.l.b16 %v226
        %v243 = vunpack.c.l.b16 %v227
        %v244 = vunpack.c.l.b16 %v228
        %v245 = vunpack.c.l.b16 %v229
        %v246 = vunpack.c.l.b16 %v230
        %v247 = vunpack.c.l.b16 %v231
        %v248 = vpack.c.b16 %v241, %v240
        %v249 = vpack.c.b16 %v243, %v242
        %v250 = vpack.c.b16 %v245, %v244
        %v251 = vpack.c.b16 %v247, %v246
        %vm256 = vcmask 523264
        %v258 = vsel %vm256, %v223, 0
        %260 = vmatpush.bf16.msra.mxu0 0
        %261 = vmatpush.bf16.msra.mxu0 0
        %262 = vmatpush.bf16.msra.mxu0 0
        %263 = vmatpush.bf16.msra.mxu0 0
        %264 = vmatpush.bf16.msra.mxu0 %v251
        %265 = vmatpush.bf16.msra.mxu0 %v250
        %266 = vmatpush.bf16.msra.mxu0 %v249
        %267 = vmatpush.bf16.msra.mxu0 %v248
        %268 = vmatmul.bf16.gmra.mxu0 %v258
        %v269 = vpop.f32.mrf.mxu0
        %v270 = vadd.f32 0.0, %v269
        %v271 = vpop.f32.mrf.mxu0
        %272 = vdwg.mxu0
        %v273 = vmax.f32 %v270, 0.0
        %v274 = vpack.c.bf16 %v273, %v273
        %v275 = vld [vmem:[#allocation6] sm:$0xf]
        %v276 = vld [vmem:[#allocation6 + $0x4] sm:$0xf]
        %v277 = vld [vmem:[#allocation6 + $0x8] sm:$0xf]
        %v278 = vld [vmem:[#allocation6 + $0xc] sm:$0xf]
        %v279 = vld [vmem:[#allocation6 + $0x10] sm:$0xf]
        %v280 = vld [vmem:[#allocation6 + $0x14] sm:$0xf]
        %v281 = vld [vmem:[#allocation6 + $0x18] sm:$0xf]
        %v282 = vld [vmem:[#allocation6 + $0x1c] sm:$0xf]
        %v283 = vld [vmem:[#allocation6 + $0x20] sm:$0xf]
        %v284 = vld [vmem:[#allocation6 + $0x24] sm:$0xf]
        %v285 = vld [vmem:[#allocation6 + $0x28] sm:$0xf]
        %v286 = vld [vmem:[#allocation6 + $0x2c] sm:$0xf]
        %v287 = vld [vmem:[#allocation6 + $0x30] sm:$0xf]
        %v288 = vld [vmem:[#allocation6 + $0x34] sm:$0xf]
        %v289 = vld [vmem:[#allocation6 + $0x38] sm:$0xf]
        %v290 = vld [vmem:[#allocation6 + $0x3c] sm:$0xf]
        %v307 = vunpack.c.l.b16 %v275
        %v308 = vunpack.c.l.b16 %v276
        %v309 = vunpack.c.l.b16 %v277
        %v310 = vunpack.c.l.b16 %v278
        %v311 = vunpack.c.l.b16 %v279
        %v312 = vunpack.c.l.b16 %v280
        %v313 = vunpack.c.l.b16 %v281
        %v314 = vunpack.c.l.b16 %v282
        %v315 = vunpack.c.l.b16 %v283
        %v316 = vunpack.c.l.b16 %v284
        %v317 = vunpack.c.l.b16 %v285
        %v318 = vunpack.c.l.b16 %v286
        %v319 = vunpack.c.l.b16 %v287
        %v320 = vunpack.c.l.b16 %v288
        %v321 = vunpack.c.l.b16 %v289
        %v322 = vunpack.c.l.b16 %v290
        %v323 = vpack.c.b16 %v308, %v307
        %v324 = vpack.c.b16 %v310, %v309
        %v325 = vpack.c.b16 %v312, %v311
        %v326 = vpack.c.b16 %v314, %v313
        %v327 = vpack.c.b16 %v316, %v315
        %v328 = vpack.c.b16 %v318, %v317
        %v329 = vpack.c.b16 %v320, %v319
        %v330 = vpack.c.b16 %v322, %v321
        %339 = vmatpush.bf16.msra.mxu0 %v330
        %340 = vmatpush.bf16.msra.mxu0 %v329
        %341 = vmatpush.bf16.msra.mxu0 %v328
        %342 = vmatpush.bf16.msra.mxu0 %v327
        %343 = vmatpush.bf16.msra.mxu0 %v326
        %344 = vmatpush.bf16.msra.mxu0 %v325
        %345 = vmatpush.bf16.msra.mxu0 %v324
        %346 = vmatpush.bf16.msra.mxu0 %v323
        %347 = vmatmul.bf16.gmra.mxu0 %v274
        %v348 = vpop.f32.mrf.mxu0
        %v349 = vadd.f32 0.0, %v348
        %v350 = vpop.f32.mrf.mxu0
        %351 = vdwg.mxu0
        %352 = vst [vmem:[%s220] sm:$0xff] %v349
        %p353 = scmp.lt.s32.totalorder %s18, 1
        %s354 = scalar_select %p353, %s18, 1
        %s355 = smul.addr %s354, 8
        %s356 = scalar_lea.vmem %s3, %s355
        // Predicated region
        $region45: #{_forward.1} parent=31 // pred_check
          %p357 = pneg %p104
        $region46: #{_forward.1} parent=31 // pred_check_branch
          %359 = sbr.rel (%p357) target = $region48
        $region47: #{_forward.1} parent=31 // pred_region
          _
        $region48: #{_forward.1} parent=31 // pred_fallthru
          _
      $region32: #{_forward.1} parent=5 // pred_fallthru
        _
      %p360 = scmp.le.s32.totalorder 2, %s13
      // Predicated region
      $region49: #{_forward.1} parent=5 // pred_check
        %p361 = pneg %p360
      $region50: #{_forward.1} parent=5 // pred_check_branch
        %363 = sbr.rel (%p361) target = $region52
      $region51: #{_forward.1} parent=5 // pred_region
        %s364 = ssub.s32 %s13, 2
        // Predicated region
        $region53: #{_forward.1} parent=51 // pred_check
          %p365 = pneg %p110
        $region54: #{_forward.1} parent=51 // pred_check_branch
          %367 = sbr.rel (%p365) target = $region56
        $region55: #{_forward.1} parent=51 // pred_region
          %p368 = scmp.lt.s32.totalorder %s19, 1
          %s369 = scalar_select %p368, %s19, 1
          %s370 = smul.addr %s369, 8
          %s371 = scalar_lea.vmem %s3, %s370
        $region56: #{_forward.1} parent=51 // pred_fallthru
          _
      $region52: #{_forward.1} parent=5 // pred_fallthru
        _
    $region6: #{_forward.1} parent=1 // loop_footer
      %s17 = sadd.s32 1, %s13
    $region7: #{_forward.1} parent=1 // loop_footer_branch
      %12 = sbr.rel target = $region3
    $region8: #{_forward.1} parent=1 // loop_exit
      _
    %372 = vsyncpa [#allocation3], 1
    %s373 = scalar_lea.sflag [#allocation3], 1
    %374 = vsyncpa %s373, 1
    %375 = vsyncpa [#allocation5], 1

// kernel: _forward.1
$region0: #{_forward.1}
  #allocation0 [shape = 'u32[]', space=smem, size = 0x4, offset = 0x4, fixed_abs, tag = 'smem constant byte address 0x4 - core index']
  #allocation1 [shape = 'u32[72,128]{1,0:T(1,128)}', space=vmem, size = 0x9000, scoped, tag = 'internal scratch']
  %s0 = inlined_call_operand.hbm [shape: f32[16,64], index: 0, kind: input, shape index: {}]
  %s1 = inlined_call_operand.hbm [shape: bf16[64,128], index: 1, kind: input, shape index: {}]
  %s2 = inlined_call_operand.hbm [shape: bf16[128,128], index: 2, kind: input, shape index: {}]
  %s3 = inlined_call_operand.vmem [shape: f32[16,128], index: 3, kind: output, shape index: {}]
  %s4 = sld [smem:[#allocation0]]
  $region57: #{_forward.1} parent=0
    _
  %s6 = ssub.s32 1, %s4
  %s7 = scalar_select 0, %s6, %s4
  $region1: #{_forward.1} parent=0
    #allocation2 [shape = 'u8[8192]{0}', space=vmem, size = 0x2000, scoped, tag = 'input window, operand 0']
    #allocation3 [shape = 's32[2]{0}', space=sflag, size = 0x8, scoped, tag = 'scoped memory for _forward.1']
    #allocation4 [shape = 'u8[16384]{0}', space=vmem, size = 0x4000, scoped, tag = 'input window, operand 1, single buffered']
    #allocation5 [shape = 's32[1]{0}', space=sflag, size = 0x4, scoped, tag = 'scoped memory for _forward.1']
    #allocation6 [shape = 'u8[32768]{0}', space=vmem, size = 0x8000, scoped, tag = 'input window, operand 2, single buffered']
    %8 = vsyncpa [#allocation3], 0
    %s9 = scalar_lea.sflag [#allocation3], 1
    %10 = vsyncpa %s9, 0
    %11 = vsyncpa [#allocation5], 0
    loop: start=0, step=1, limit=4
    $region2: #{_forward.1} parent=1 // loop_pre_header
      _
    $region3: #{_forward.1} parent=1 // loop_header
      %s13 = sphi 0, %s17
      %p14 = scmp.ge.s32.totalorder %s13, 4
      %s23 = sphi 0, %s25
      %s26 = sphi 0, %s23
      %s27 = sphi 0, %s26
      %s43 = sphi 0, %s27
      %s47 = sphi 0, %s47
      %s49 = sphi 0, %s47
      %s50 = sphi 0, %s49
      %s64 = sphi 0, %s50
      %s68 = sphi 0, %s68
      %s70 = sphi 0, %s68
      %s71 = sphi 0, %s70
      %s85 = sphi 0, %s71
      %s91 = sphi 0, %s93
      %s94 = sphi 0, %s91
      %s95 = sphi 0, %s94
      %s111 = sphi 0, %s95
    $region4: #{_forward.1} parent=1 // loop_header_branch
      %16 = sbr.rel (%p14) target = $region8
    $region5: #{_forward.1} parent=1 // loop_body
      %s18 = ssub.s32 %s13, 1
      %s19 = ssub.s32 %s13, 2
      %s20 = sadd.s32 %s13, 1
      %s21 = ssub.s32 %s13, %s20
      %p22 = scmp.eq.s32.totalorder %s21, 0
      %s24 = sadd.s32 %s23, 1
      %s25 = scalar_select %p22, %s23, %s24
      %p28 = pneg %p22
      %p29 = scmp.eq.s32.totalorder %s13, 1
      %p30 = por %p28, %p29
      %p31 = scmp.ne.s32.totalorder %s23, %s26
      %p32 = scmp.eq.s32.totalorder %s13, 0
      %p33 = por %p31, %p32
      %p34 = scmp.ne.s32.totalorder %s23, %s26
      %p35 = scmp.eq.s32.totalorder %s18, 1
      %p36 = por %p34, %p35
      %p37 = scmp.ne.s32.totalorder %s26, %s27
      %p38 = scmp.eq.s32.totalorder %s18, 0
      %p39 = por %p37, %p38
      %p40 = scmp.ne.s32.totalorder %s26, %s27
      %p41 = scmp.eq.s32.totalorder %s19, 1
      %p42 = por %p40, %p41
      %p44 = scmp.ne.s32.totalorder %s27, %s43
      %p45 = scmp.eq.s32.totalorder %s19, 0
      %p46 = por %p44, %p45
      %s48 = sadd.s32 %s47, 1
      %p51 = scmp.eq.s32.totalorder %s13, 1
      %p52 = scmp.ne.s32.totalorder %s47, %s49
      %p53 = scmp.eq.s32.totalorder %s13, 0
      %p54 = por %p52, %p53
      %p55 = scmp.ne.s32.totalorder %s47, %s49
      %p56 = scmp.eq.s32.totalorder %s18, 1
      %p57 = por %p55, %p56
      %p58 = scmp.ne.s32.totalorder %s49, %s50
      %p59 = scmp.eq.s32.totalorder %s18, 0
      %p60 = por %p58, %p59
      %p61 = scmp.ne.s32.totalorder %s49, %s50
      %p62 = scmp.eq.s32.totalorder %s19, 1
      %p63 = por %p61, %p62
      %p65 = scmp.ne.s32.totalorder %s50, %s64
      %p66 = scmp.eq.s32.totalorder %s19, 0
      %p67 = por %p65, %p66
      %s69 = sadd.s32 %s68, 1
      %p72 = scmp.eq.s32.totalorder %s13, 1
      %p73 = scmp.ne.s32.totalorder %s68, %s70
      %p74 = scmp.eq.s32.totalorder %s13, 0
      %p75 = por %p73, %p74
      %p76 = scmp.ne.s32.totalorder %s68, %s70
      %p77 = scmp.eq.s32.totalorder %s18, 1
      %p78 = por %p76, %p77
      %p79 = scmp.ne.s32.totalorder %s70, %s71
      %p80 = scmp.eq.s32.totalorder %s18, 0
      %p81 = por %p79, %p80
      %p82 = scmp.ne.s32.totalorder %s70, %s71
      %p83 = scmp.eq.s32.totalorder %s19, 1
      %p84 = por %p82, %p83
      %p86 = scmp.ne.s32.totalorder %s71, %s85
      %p87 = scmp.eq.s32.totalorder %s19, 0
      %p88 = por %p86, %p87
      %s89 = ssub.s32 %s13, %s20
      %p90 = scmp.eq.s32.totalorder %s89, 0
      %s92 = sadd.s32 %s91, 1
      %s93 = scalar_select %p90, %s91, %s92
      %p96 = pneg %p90
      %p97 = scmp.eq.s32.totalorder %s13, 1
      %p98 = por %p96, %p97
      %p99 = scmp.ne.s32.totalorder %s91, %s94
      %p100 = scmp.eq.s32.totalorder %s13, 0
      %p101 = por %p99, %p100
      %p102 = scmp.ne.s32.totalorder %s91, %s94
      %p103 = scmp.eq.s32.totalorder %s18, 1
      %p104 = por %p102, %p103
      %p105 = scmp.ne.s32.totalorder %s94, %s95
      %p106 = scmp.eq.s32.totalorder %s18, 0
      %p107 = por %p105, %p106
      %p108 = scmp.ne.s32.totalorder %s94, %s95
      %p109 = scmp.eq.s32.totalorder %s19, 1
      %p110 = por %p108, %p109
      %p112 = scmp.ne.s32.totalorder %s95, %s111
      %p113 = scmp.eq.s32.totalorder %s19, 0
      %p114 = por %p112, %p113
      %p115 = scmp.le.s32.totalorder 1, %s13
      %p116 = scmp.lt.s32.totalorder %s13, 3
      %p117 = pnand %p115, %p116
      %p118 = pneg %p117
      // Predicated region
      $region9: #{_forward.1} parent=5 // pred_check
        _
      $region10: #{_forward.1} parent=5 // pred_check_branch
        %120 = sbr.rel (%p117) target = $region12
      $region11: #{_forward.1} parent=5 // pred_region
        %s121 = ssub.s32 %s13, 1
        // Predicated region
        $region13: #{_forward.1} parent=11 // pred_check
          %p122 = pneg %p60
        $region14: #{_forward.1} parent=11 // pred_check_branch
          %124 = sbr.rel (%p122) target = $region16
        $region15: #{_forward.1} parent=11 // pred_region
          %126 = vsyncadd [#allocation5], 0
          %s127 = sshll.u32 %s1, 4
          %s128 = int_to_ptr.hbm [resolvable:$true] %s127
          %s129 = sshll.u32 [#allocation4], 4
          %s130 = int_to_ptr.vmem [resolvable:$true] %s129
          %135 = dma.hbm_to_vmem [thread:$0]  %s128, 512, %s130, [#allocation5], 64, 64, 4
        $region16: #{_forward.1} parent=11 // pred_fallthru
          _
        // Predicated region
        $region17: #{_forward.1} parent=11 // pred_check
          %p136 = pneg %p81
        $region18: #{_forward.1} parent=11 // pred_check_branch
          %138 = sbr.rel (%p136) target = $region20
        $region19: #{_forward.1} parent=11 // pred_region
          %140 = vsyncadd [#allocation5], 0
          %s141 = sshll.u32 %s2, 4
          %s142 = int_to_ptr.hbm [resolvable:$true] %s141
          %s143 = sshll.u32 [#allocation6], 4
          %s144 = int_to_ptr.vmem [resolvable:$true] %s143
          %149 = dma.hbm_to_vmem [thread:$0]  %s142, 1024, %s144, [#allocation5], 64, 64, 4
        $region20: #{_forward.1} parent=11 // pred_fallthru
          _
      $region12: #{_forward.1} parent=5 // pred_fallthru
        _
      %p150 = scmp.lt.s32.totalorder %s13, 2
      // Predicated region
      $region21: #{_forward.1} parent=5 // pred_check
        %p151 = pneg %p150
      $region22: #{_forward.1} parent=5 // pred_check_branch
        %153 = sbr.rel (%p151) target = $region24
      $region23: #{_forward.1} parent=5 // pred_region
        // Predicated region
        $region25: #{_forward.1} parent=23 // pred_check
          %p154 = pneg %p33
        $region26: #{_forward.1} parent=23 // pred_check_branch
          %156 = sbr.rel (%p154) target = $region28
        $region27: #{_forward.1} parent=23 // pred_region
          %s157 = sand.u32 %s23, 1
          %s158 = scalar_lea.sflag [#allocation3], %s157
          %s159 = sand.u32 %s23, 1
          %s160 = smul.addr %s159, 8
          %s161 = scalar_lea.vmem [#allocation2], %s160
          %163 = vsyncadd %s158, 0
          %s164 = smul.addr %s13, 8
          %s165 = scalar_lea.hbm %s0, %s164
          %s167 = sshll.u32 %s165, 4
          %s168 = int_to_ptr.hbm [resolvable:$true] %s167
          %s169 = sshll.u32 %s161, 4
          %s170 = int_to_ptr.vmem [resolvable:$true] %s169
          %172 = dma.hbm_to_vmem [thread:$0]  %s168, 128, %s170, %s158
        $region28: #{_forward.1} parent=23 // pred_fallthru
          _
      $region24: #{_forward.1} parent=5 // pred_fallthru
        _
      %p173 = scmp.le.s32.totalorder 1, %s13
      %p174 = scmp.lt.s32.totalorder %s13, 3
      %p175 = pnand %p173, %p174
      %p176 = pneg %p175
      // Predicated region
      $region29: #{_forward.1} parent=5 // pred_check
        _
      $region30: #{_forward.1} parent=5 // pred_check_branch
        %178 = sbr.rel (%p175) target = $region32
      $region31: #{_forward.1} parent=5 // pred_region
        %s179 = ssub.s32 %s13, 1
        %s180 = sand.u32 %s26, 1
        %s181 = scalar_lea.sflag [#allocation3], %s180
        %s182 = sand.u32 %s26, 1
        %s183 = smul.addr %s182, 8
        %s184 = scalar_lea.vmem [#allocation2], %s183
        // Predicated region
        $region33: #{_forward.1} parent=31 // pred_check
          %p185 = pneg %p39
        $region34: #{_forward.1} parent=31 // pred_check_branch
          %187 = sbr.rel (%p185) target = $region36
        $region35: #{_forward.1} parent=31 // pred_region
          %189 = dma.done %s181, 128
        $region36: #{_forward.1} parent=31 // pred_fallthru
          _
        // Predicated region
        $region37: #{_forward.1} parent=31 // pred_check
          %p190 = pneg %p60
        $region38: #{_forward.1} parent=31 // pred_check_branch
          %192 = sbr.rel (%p190) target = $region40
        $region39: #{_forward.1} parent=31 // pred_region
          %194 = dma.done [#allocation5], 512
        $region40: #{_forward.1} parent=31 // pred_fallthru
          _
        // Predicated region
        $region41: #{_forward.1} parent=31 // pred_check
          %p195 = pneg %p81
        $region42: #{_forward.1} parent=31 // pred_check_branch
          %197 = sbr.rel (%p195) target = $region44
        $region43: #{_forward.1} parent=31 // pred_region
          %199 = dma.done [#allocation5], 1024
        $region44: #{_forward.1} parent=31 // pred_fallthru
          _
        %s200 = sand.u32 %s26, 1
        %s201 = scalar_lea.sflag [#allocation3], %s200
        %s202 = sand.u32 %s26, 1
        %s203 = smul.addr %s202, 8
        %s204 = scalar_lea.vmem [#allocation2], %s203
        %p205 = pneg %p39
        %p206 = pneg %p36
        %p207 = pneg %p60
        %p208 = pneg %p57
        %p209 = pneg %p81
        %p210 = pneg %p78
        %p211 = pneg %p107
        %p212 = pneg %p104
        %p213 = scmp.lt.s32.totalorder %s18, 1
        %s214 = scalar_select %p213, %s18, 1
        %s215 = smul.addr %s214, 8
        %s216 = scalar_lea.vmem %s3, %s215
        %p217 = scmp.lt.s32.totalorder %s18, 1
        %s218 = scalar_select %p217, %s18, 1
        %s219 = smul.addr %s218, 8
        %s220 = scalar_lea.vmem %s3, %s219
        %v222 = vld [vmem:[%s184] sm:$0xff]
        %v223 = vpack.c.bf16 %v222, %v222
        %v224 = vld [vmem:[#allocation4] sm:$0xf]
        %v225 = vld [vmem:[#allocation4 + $0x4] sm:$0xf]
        %v226 = vld [vmem:[#allocation4 + $0x8] sm:$0xf]
        %v227 = vld [vmem:[#allocation4 + $0xc] sm:$0xf]
        %v228 = vld [vmem:[#allocation4 + $0x10] sm:$0xf]
        %v229 = vld [vmem:[#allocation4 + $0x14] sm:$0xf]
        %v230 = vld [vmem:[#allocation4 + $0x18] sm:$0xf]
        %v231 = vld [vmem:[#allocation4 + $0x1c] sm:$0xf]
        %v240 = vunpack.c.l.b16 %v224
        %v241 = vunpack.c.l.b16 %v225
        %v242 = vunpack.c.l.b16 %v226
        %v243 = vunpack.c.l.b16 %v227
        %v244 = vunpack.c.l.b16 %v228
        %v245 = vunpack.c.l.b16 %v229
        %v246 = vunpack.c.l.b16 %v230
        %v247 = vunpack.c.l.b16 %v231
        %v248 = vpack.c.b16 %v241, %v240
        %v249 = vpack.c.b16 %v243, %v242
        %v250 = vpack.c.b16 %v245, %v244
        %v251 = vpack.c.b16 %v247, %v246
        %vm256 = vcmask 523264
        %v258 = vsel %vm256, %v223, 0
        %260 = vmatpush.bf16.msra.mxu0 0
        %261 = vmatpush.bf16.msra.mxu0 0
        %262 = vmatpush.bf16.msra.mxu0 0
        %263 = vmatpush.bf16.msra.mxu0 0
        %264 = vmatpush.bf16.msra.mxu0 %v251
        %265 = vmatpush.bf16.msra.mxu0 %v250
        %266 = vmatpush.bf16.msra.mxu0 %v249
        %267 = vmatpush.bf16.msra.mxu0 %v248
        %268 = vmatmul.bf16.gmra.mxu0 %v258
        %v269 = vpop.f32.mrf.mxu0
        %v270 = vadd.f32 0.0, %v269
        %v271 = vpop.f32.mrf.mxu0
        %272 = vdwg.mxu0
        %v273 = vmax.f32 %v270, 0.0
        %v274 = vpack.c.bf16 %v273, %v273
        %v275 = vld [vmem:[#allocation6] sm:$0xf]
        %v276 = vld [vmem:[#allocation6 + $0x4] sm:$0xf]
        %v277 = vld [vmem:[#allocation6 + $0x8] sm:$0xf]
        %v278 = vld [vmem:[#allocation6 + $0xc] sm:$0xf]
        %v279 = vld [vmem:[#allocation6 + $0x10] sm:$0xf]
        %v280 = vld [vmem:[#allocation6 + $0x14] sm:$0xf]
        %v281 = vld [vmem:[#allocation6 + $0x18] sm:$0xf]
        %v282 = vld [vmem:[#allocation6 + $0x1c] sm:$0xf]
        %v283 = vld [vmem:[#allocation6 + $0x20] sm:$0xf]
        %v284 = vld [vmem:[#allocation6 + $0x24] sm:$0xf]
        %v285 = vld [vmem:[#allocation6 + $0x28] sm:$0xf]
        %v286 = vld [vmem:[#allocation6 + $0x2c] sm:$0xf]
        %v287 = vld [vmem:[#allocation6 + $0x30] sm:$0xf]
        %v288 = vld [vmem:[#allocation6 + $0x34] sm:$0xf]
        %v289 = vld [vmem:[#allocation6 + $0x38] sm:$0xf]
        %v290 = vld [vmem:[#allocation6 + $0x3c] sm:$0xf]
        %v307 = vunpack.c.l.b16 %v275
        %v308 = vunpack.c.l.b16 %v276
        %v309 = vunpack.c.l.b16 %v277
        %v310 = vunpack.c.l.b16 %v278
        %v311 = vunpack.c.l.b16 %v279
        %v312 = vunpack.c.l.b16 %v280
        %v313 = vunpack.c.l.b16 %v281
        %v314 = vunpack.c.l.b16 %v282
        %v315 = vunpack.c.l.b16 %v283
        %v316 = vunpack.c.l.b16 %v284
        %v317 = vunpack.c.l.b16 %v285
        %v318 = vunpack.c.l.b16 %v286
        %v319 = vunpack.c.l.b16 %v287
        %v320 = vunpack.c.l.b16 %v288
        %v321 = vunpack.c.l.b16 %v289
        %v322 = vunpack.c.l.b16 %v290
        %v323 = vpack.c.b16 %v308, %v307
        %v324 = vpack.c.b16 %v310, %v309
        %v325 = vpack.c.b16 %v312, %v311
        %v326 = vpack.c.b16 %v314, %v313
        %v327 = vpack.c.b16 %v316, %v315
        %v328 = vpack.c.b16 %v318, %v317
        %v329 = vpack.c.b16 %v320, %v319
        %v330 = vpack.c.b16 %v322, %v321
        %339 = vmatpush.bf16.msra.mxu0 %v330
        %340 = vmatpush.bf16.msra.mxu0 %v329
        %341 = vmatpush.bf16.msra.mxu0 %v328
        %342 = vmatpush.bf16.msra.mxu0 %v327
        %343 = vmatpush.bf16.msra.mxu0 %v326
        %344 = vmatpush.bf16.msra.mxu0 %v325
        %345 = vmatpush.bf16.msra.mxu0 %v324
        %346 = vmatpush.bf16.msra.mxu0 %v323
        %347 = vmatmul.bf16.gmra.mxu0 %v274
        %v348 = vpop.f32.mrf.mxu0
        %v349 = vadd.f32 0.0, %v348
        %v350 = vpop.f32.mrf.mxu0
        %351 = vdwg.mxu0
        %352 = vst [vmem:[%s220] sm:$0xff] %v349
        %p353 = scmp.lt.s32.totalorder %s18, 1
        %s354 = scalar_select %p353, %s18, 1
        %s355 = smul.addr %s354, 8
        %s356 = scalar_lea.vmem %s3, %s355
        // Predicated region
        $region45: #{_forward.1} parent=31 // pred_check
          %p357 = pneg %p104
        $region46: #{_forward.1} parent=31 // pred_check_branch
          %359 = sbr.rel (%p357) target = $region48
        $region47: #{_forward.1} parent=31 // pred_region
          _
        $region48: #{_forward.1} parent=31 // pred_fallthru
          _
      $region32: #{_forward.1} parent=5 // pred_fallthru
        _
      %p360 = scmp.le.s32.totalorder 2, %s13
      // Predicated region
      $region49: #{_forward.1} parent=5 // pred_check
        %p361 = pneg %p360
      $region50: #{_forward.1} parent=5 // pred_check_branch
        %363 = sbr.rel (%p361) target = $region52
      $region51: #{_forward.1} parent=5 // pred_region
        %s364 = ssub.s32 %s13, 2
        // Predicated region
        $region53: #{_forward.1} parent=51 // pred_check
          %p365 = pneg %p110
        $region54: #{_forward.1} parent=51 // pred_check_branch
          %367 = sbr.rel (%p365) target = $region56
        $region55: #{_forward.1} parent=51 // pred_region
          %p368 = scmp.lt.s32.totalorder %s19, 1
          %s369 = scalar_select %p368, %s19, 1
          %s370 = smul.addr %s369, 8
          %s371 = scalar_lea.vmem %s3, %s370
        $region56: #{_forward.1} parent=51 // pred_fallthru
          _
      $region52: #{_forward.1} parent=5 // pred_fallthru
        _
    $region6: #{_forward.1} parent=1 // loop_footer
      %s17 = sadd.s32 1, %s13
    $region7: #{_forward.1} parent=1 // loop_footer_branch
      %12 = sbr.rel target = $region3
    $region8: #{_forward.1} parent=1 // loop_exit
      _
    %372 = vsyncpa [#allocation3], 1
    %s373 = scalar_lea.sflag [#allocation3], 1
    %374 = vsyncpa %s373, 1
    %375 = vsyncpa [#allocation5], 1

</llo_original>
